<compile_context>
chip_gen: v7x
topology: tpu7x:2x2x1
jax: 0.10.0
libtpu: 0.0.40
codegen_flags: <defaults>
</compile_context>

<pallas_src>
from typing import NamedTuple

import jax
import jax.numpy as jnp
from jax.experimental import pallas as pl
from jax.experimental.pallas import tpu as pltpu


def _round_up(x, m):
    return ((x + m - 1) // m) * m


class PromptMeta(NamedTuple):
    num_layers: int        # L (real layer count)
    padded_layers: int     # Lp (multiple of layers_per_step)
    layers_per_step: int   # LS (block along the layer axis)
    n_tok: int             # rep tokens per layer
    rows_pad: int          # packed row count (multiple of 8)
    d_aug: int             # packed contraction dim (D + 1 ones col, padded)
    hidden: int            # MLP hidden width H
    text_dim: int          # T
    visual_dim: int        # V
    text_pad: int          # Tp = round_up(T, 128)
    out_width: int         # P = Tp + round_up(V, 128)


# ---------------------------------------------------------------------------
# Kernel
# ---------------------------------------------------------------------------
def fused_prompt_kernel(x_ref, w1_ref, w2t_ref, w2v_ref, b2_ref, o_ref):
    """One grid step = LS layers (LS small, default 1, so the Python unroll
    stays tiny and vreg live ranges stay bounded)."""
    h_half = w1_ref.shape[-1] // 2            # H
    for j in range(x_ref.shape[0]):           # LS iterations (trace-time const)
        x = x_ref[j]                          # (rows_pad, d_aug), compute dtype
        # Layer 1 (+ folded b1 via the ones-column in x); f32 accumulate.
        h = jnp.dot(x, w1_ref[j], preferred_element_type=jnp.float32)
        h = jnp.maximum(h, 0.0)               # ReLU in f32
        hc = h.astype(w2t_ref.dtype)          # back to compute dtype for MXU
        # Layer 2: two small dots on the h-halves (no zero-filled block-diag).
        o_text = jnp.dot(hc[:, :h_half], w2t_ref[j],
                         preferred_element_type=jnp.float32)
        o_vis = jnp.dot(hc[:, h_half:], w2v_ref[j],
                        preferred_element_type=jnp.float32)
        # Concatenate in registers, add bias in f32, single lane-dense store.
        o = jnp.concatenate([o_text, o_vis], axis=-1) + b2_ref[j]
        o_ref[j] = o.astype(o_ref.dtype)


# ---------------------------------------------------------------------------
# Parameter-only packing (run once, NOT per forward call)
# ---------------------------------------------------------------------------
def pack_prompt_operands(params, compute_dtype=jnp.float32, layers_per_step=1):
    rep = params["compound_rep_prompts"]          # (L, N_tok, D)
    xt = params["extra_textual_prompts"]          # (L, 2, D)
    xv = params["extra_visual_prompts"]           # (L, 2, D)

    L, n_tok, D = rep.shape
    H = params["w1t"].shape[-1]
    T = params["w2t"].shape[-1]
    V = params["w2v"].shape[-1]

    LS = max(1, int(layers_per_step))
    assert LS <= 8, "keep the in-kernel unroll small"
    Lp = _round_up(L, LS)
    R = n_tok + 4                                 # rep rows + 2 text + 2 visual
    rows_pad = _round_up(R, 8)
    d_aug = _round_up(D + 1, 16)                  # D + ones column, layout-friendly
    Tp = _round_up(T, 128)
    Vp = _round_up(V, 128)
    P = Tp + Vp
    f32 = jnp.float32

    # --- activations: [rep ; extra_text ; extra_vis ; row pad] + ones column
    x = jnp.concatenate([rep, xt, xv], axis=1).astype(f32)            # (L, R, D)
    x = jnp.pad(x, ((0, Lp - L), (0, rows_pad - R), (0, 0)))
    ones = jnp.ones((Lp, rows_pad, 1), f32)
    x_aug = jnp.concatenate([x, ones], axis=-1)                       # (..., D+1)
    x_aug = jnp.pad(x_aug, ((0, 0), (0, 0), (0, d_aug - (D + 1))))
    x_aug = x_aug.astype(compute_dtype)                               # (Lp, rows_pad, d_aug)

    # --- layer 1: [w1t | w1v] with bias row appended (aligned with ones col)
    w1 = jnp.concatenate([params["w1t"], params["w1v"]], axis=-1).astype(f32)   # (L, D, 2H)
    b1 = jnp.concatenate([params["b1t"], params["b1v"]], axis=-1).astype(f32)   # (L, 1, 2H)
    w1_aug = jnp.concatenate([w1, b1], axis=1)                                   # (L, D+1, 2H)
    w1_aug = jnp.pad(w1_aug, ((0, Lp - L), (0, d_aug - (D + 1)), (0, 0)))
    w1_aug = w1_aug.astype(compute_dtype)                             # (Lp, d_aug, 2H)

    # --- layer 2: separate lane-padded text / visual weights, merged bias
    w2t = jnp.pad(params["w2t"].astype(f32),
                  ((0, Lp - L), (0, 0), (0, Tp - T))).astype(compute_dtype)      # (Lp, H, Tp)
    w2v = jnp.pad(params["w2v"].astype(f32),
                  ((0, Lp - L), (0, 0), (0, Vp - V))).astype(compute_dtype)      # (Lp, H, Vp)
    b2t = jnp.pad(params["b2t"].astype(f32), ((0, Lp - L), (0, 0), (0, Tp - T)))
    b2v = jnp.pad(params["b2v"].astype(f32), ((0, Lp - L), (0, 0), (0, Vp - V)))
    b2 = jnp.concatenate([b2t, b2v], axis=-1)                          # (Lp, 1, P) f32

    meta = PromptMeta(L, Lp, LS, n_tok, rows_pad, d_aug, H, T, V, Tp, P)
    return (x_aug, w1_aug, w2t, w2v, b2), meta


def _vmem_limit_bytes(meta, itemsize=4):
    """Conservative padded per-step footprint x double-buffering + headroom."""
    def tile(rows, cols, isz):
        return _round_up(rows, 8) * _round_up(cols, 128) * isz

    per_layer = (tile(meta.rows_pad, meta.d_aug, itemsize)
                 + tile(meta.d_aug, 2 * meta.hidden, itemsize)
                 + tile(meta.hidden, meta.text_pad, itemsize)
                 + tile(meta.hidden, meta.out_width - meta.text_pad, itemsize)
                 + tile(1, meta.out_width, 4)
                 + tile(meta.rows_pad, meta.out_width, 4))
    per_step = per_layer * meta.layers_per_step
    # 2x double buffers, 4x headroom for compiler scratch; floor 8 MiB,
    # cap 32 MiB (safe on v5e/v6e/v7x).
    return int(min(max(8 * per_step, 8 << 20), 32 << 20))


# ---------------------------------------------------------------------------
# Forward builder (jitted; call with the pre-packed operands)
# ---------------------------------------------------------------------------
def make_fused_prompt_forward(meta, out_dtype=jnp.float32,
                              vmem_limit_bytes=None, interpret=False):
    LS = meta.layers_per_step
    grid = (meta.padded_layers // LS,)

    def spec(rows, cols):
        return pl.BlockSpec((LS, rows, cols), lambda g: (g, 0, 0))

    if vmem_limit_bytes is None:
        vmem_limit_bytes = _vmem_limit_bytes(meta)

    call = pl.pallas_call(
        fused_prompt_kernel,
        out_shape=jax.ShapeDtypeStruct(
            (meta.padded_layers, meta.rows_pad, meta.out_width), jnp.float32),
        grid_spec=pl.GridSpec(
            grid=grid,
            in_specs=[
                spec(meta.rows_pad, meta.d_aug),                     # activations (+ones)
                spec(meta.d_aug, 2 * meta.hidden),                   # [w1t|w1v ; b1]
                spec(meta.hidden, meta.text_pad),                    # w2t (lane-padded)
                spec(meta.hidden, meta.out_width - meta.text_pad),   # w2v (lane-padded)
                spec(1, meta.out_width),                             # [b2t|b2v] (f32)
            ],
            out_specs=spec(meta.rows_pad, meta.out_width),
        ),
        compiler_params=pltpu.CompilerParams(
            dimension_semantics=("parallel",),
            vmem_limit_bytes=vmem_limit_bytes,
        ),
        interpret=interpret,
    )

    L, n, T, Tp, V = (meta.num_layers, meta.n_tok, meta.text_dim,
                      meta.text_pad, meta.visual_dim)

    def forward(x_aug, w1_aug, w2t, w2v, b2):
        slab = call(x_aug, w1_aug, w2t, w2v, b2)        # (Lp, rows_pad, P) f32
        text = slab[:L, :n, :T].astype(out_dtype)       # compound_rep_tokens_text
        vis = slab[:L, :n, Tp:Tp + V].astype(out_dtype) # compound_rep_tokens_visual
        rdy_t = slab[:L, n:n + 2, :T]                   # ready shared textual tokens
        rdy_v = slab[:L, n + 2:n + 4, Tp:Tp + V]        # ready shared visual tokens
        return text, vis, rdy_t, rdy_v

    return jax.jit(forward)


def prompt_learner_forward(params, compute_dtype=jnp.float32,
                           out_dtype=jnp.float32, layers_per_step=1):
    """One-shot convenience wrapper.  For repeated calls, hoist
    pack_prompt_operands / make_fused_prompt_forward out of the loop."""
    ops, meta = pack_prompt_operands(params, compute_dtype, layers_per_step)
    return make_fused_prompt_forward(meta, out_dtype=out_dtype)(*ops)


# ---------------------------------------------------------------------------
# Pure-JAX reference + deterministic parameter init
# ---------------------------------------------------------------------------
def _reference(params, dtype=jnp.float32):
    rep = params["compound_rep_prompts"]
    xt = params["extra_textual_prompts"]
    xv = params["extra_visual_prompts"]
    L = rep.shape[0]
    txt, vis, rdy_t, rdy_v = [], [], [], []
    for i in range(L):
        def r2t(x):
            h = jnp.maximum(x @ params["w1t"][i] + params["b1t"][i], 0.0)
            return h @ params["w2t"][i] + params["b2t"][i]

        def r2v(x):
            h = jnp.maximum(x @ params["w1v"][i] + params["b1v"][i], 0.0)
            return h @ params["w2v"][i] + params["b2v"][i]

        txt.append(r2t(rep[i]).astype(dtype))
        vis.append(r2v(rep[i]).astype(dtype))
        rdy_t.append(r2t(xt[i]))
        rdy_v.append(r2v(xv[i]))
    return (jnp.stack(txt), jnp.stack(vis), jnp.stack(rdy_t), jnp.stack(rdy_v))


def init_params(key, L, n_tok, rep_dim, hidden, text_dim, visual_dim):
    ks = jax.random.split(key, 11)
    return {
        "compound_rep_prompts": 0.02 * jax.random.normal(ks[0], (L, n_tok, rep_dim), jnp.float32),
        "extra_visual_prompts": 0.02 * jax.random.normal(ks[1], (L, 2, rep_dim), jnp.float32),
        "extra_textual_prompts": 0.02 * jax.random.normal(ks[2], (L, 2, rep_dim), jnp.float32),
        "w1t": 0.1 * jax.random.normal(ks[3], (L, rep_dim, hidden), jnp.float32),
        "b1t": 0.1 * jax.random.normal(ks[4], (L, 1, hidden), jnp.float32),
        "w2t": 0.1 * jax.random.normal(ks[5], (L, hidden, text_dim), jnp.float32),
        "b2t": 0.1 * jax.random.normal(ks[6], (L, 1, text_dim), jnp.float32),
        "w1v": 0.1 * jax.random.normal(ks[7], (L, rep_dim, hidden), jnp.float32),
        "b1v": 0.1 * jax.random.normal(ks[8], (L, 1, hidden), jnp.float32),
        "w2v": 0.1 * jax.random.normal(ks[9], (L, hidden, visual_dim), jnp.float32),
        "b2v": 0.1 * jax.random.normal(ks[10], (L, 1, visual_dim), jnp.float32),
    }


if __name__ == "__main__":
    # Small synthetic config: rep_layers_length L = 3 (odd, exercises the
    # per-layer grid with no odd-L special case), N_REP_TOKENS = 4,
    # REP_DIM = 32, MLP hidden = 32, text_dim = 64, visual_dim = 128.
    L, N_TOK, REP_DIM, HIDDEN, TEXT_DIM, VISUAL_DIM = 3, 4, 32, 32, 64, 128

    key = jax.random.PRNGKey(0)
    params = init_params(key, L, N_TOK, REP_DIM, HIDDEN, TEXT_DIM, VISUAL_DIM)
    refs = _reference(params)

    # Packing is parameter-only: done once, outside the (jitted) call path.
    ops_f32, meta = pack_prompt_operands(params, compute_dtype=jnp.float32)
    ops_bf16, _ = pack_prompt_operands(params, compute_dtype=jnp.bfloat16)
    forward = make_fused_prompt_forward(meta)

    # f32 path: tight check of the fusion (folded bias, split W2, padding).
    out_f32 = jax.block_until_ready(forward(*ops_f32))
    for o, r in zip(out_f32, refs):
        assert o.shape == r.shape and o.dtype == r.dtype, (o.shape, r.shape, o.dtype, r.dtype)
        assert jnp.allclose(o, r, atol=1e-4, rtol=1e-4)

    # bf16 path: halved weight/activation DMA bytes, MXU-native on v6e/v7x.
    out_bf16 = jax.block_until_ready(forward(*ops_bf16))
    for o, r in zip(out_bf16, refs):
        assert o.shape == r.shape
        assert jnp.allclose(o.astype(jnp.float32), r, atol=2e-2, rtol=2e-2)

    print("KERNEL_OK")
</pallas_src>

<mosaic_0001>
module attributes {stable_mosaic.version = 11 : i64} {
  func.func @fused_prompt_kernel(%arg0: i32, %arg1: memref<1x8x48xf32, #tpu.memory_space<vmem>>, %arg2: memref<1x48x64xf32, #tpu.memory_space<vmem>>, %arg3: memref<1x32x128xf32, #tpu.memory_space<vmem>>, %arg4: memref<1x32x128xf32, #tpu.memory_space<vmem>>, %arg5: memref<1x1x256xf32, #tpu.memory_space<vmem>>, %arg6: memref<1x8x256xf32, #tpu.memory_space<vmem>>) attributes {dimension_semantics = [#tpu.dimension_semantics<parallel>], iteration_bounds = array<i64: 3>, scalar_prefetch = 0 : i64, scratch_operands = 0 : i64, tpu.core_type = #tpu.core_type<tc>, window_params = [{transform_indices = @transform_0, window_bounds = array<i64: 1, 8, 48>}, {transform_indices = @transform_1, window_bounds = array<i64: 1, 48, 64>}, {transform_indices = @transform_2, window_bounds = array<i64: 1, 32, 128>}, {transform_indices = @transform_3, window_bounds = array<i64: 1, 32, 128>}, {transform_indices = @transform_4, window_bounds = array<i64: 1, 1, 256>}, {transform_indices = @transform_5, window_bounds = array<i64: 1, 8, 256>}]} {
    %c0 = arith.constant 0 : index
    %c0_0 = arith.constant 0 : index
    %c0_1 = arith.constant 0 : index
    %0 = vector.load %arg1[%c0, %c0_0, %c0_1] : memref<1x8x48xf32, #tpu.memory_space<vmem>>, vector<1x8x48xf32>
    %1 = vector.shape_cast %0 : vector<1x8x48xf32> to vector<8x48xf32>
    %c0_2 = arith.constant 0 : index
    %c0_3 = arith.constant 0 : index
    %c0_4 = arith.constant 0 : index
    %2 = vector.load %arg2[%c0_2, %c0_3, %c0_4] : memref<1x48x64xf32, #tpu.memory_space<vmem>>, vector<1x48x64xf32>
    %3 = vector.shape_cast %2 : vector<1x48x64xf32> to vector<48x64xf32>
    %cst = arith.constant dense<0.000000e+00> : vector<8x64xf32>
    %4 = tpu.matmul %1, %3, %cst {dimension_numbers = #tpu.dot_dimension_numbers<[1], [0], [0], [1], [0, 0, 1, 1], [], []>} : vector<8x48xf32>, vector<48x64xf32>, vector<8x64xf32> -> vector<8x64xf32>
    %cst_5 = arith.constant 0.000000e+00 : f32
    %5 = vector.broadcast %cst_5 : f32 to vector<8x64xf32>
    %6 = arith.maximumf %4, %5 : vector<8x64xf32>
    %7 = vector.extract_strided_slice %6 {offsets = [0, 0], sizes = [8, 32], strides = [1, 1]} : vector<8x64xf32> to vector<8x32xf32>
    %c0_6 = arith.constant 0 : index
    %c0_7 = arith.constant 0 : index
    %c0_8 = arith.constant 0 : index
    %8 = vector.load %arg3[%c0_6, %c0_7, %c0_8] : memref<1x32x128xf32, #tpu.memory_space<vmem>>, vector<1x32x128xf32>
    %9 = vector.shape_cast %8 : vector<1x32x128xf32> to vector<32x128xf32>
    %cst_9 = arith.constant dense<0.000000e+00> : vector<8x128xf32>
    %10 = tpu.matmul %7, %9, %cst_9 {dimension_numbers = #tpu.dot_dimension_numbers<[1], [0], [0], [1], [0, 0, 1, 1], [], []>} : vector<8x32xf32>, vector<32x128xf32>, vector<8x128xf32> -> vector<8x128xf32>
    %11 = vector.extract_strided_slice %6 {offsets = [0, 32], sizes = [8, 32], strides = [1, 1]} : vector<8x64xf32> to vector<8x32xf32>
    %c0_10 = arith.constant 0 : index
    %c0_11 = arith.constant 0 : index
    %c0_12 = arith.constant 0 : index
    %12 = vector.load %arg4[%c0_10, %c0_11, %c0_12] : memref<1x32x128xf32, #tpu.memory_space<vmem>>, vector<1x32x128xf32>
    %13 = vector.shape_cast %12 : vector<1x32x128xf32> to vector<32x128xf32>
    %cst_13 = arith.constant dense<0.000000e+00> : vector<8x128xf32>
    %14 = tpu.matmul %11, %13, %cst_13 {dimension_numbers = #tpu.dot_dimension_numbers<[1], [0], [0], [1], [0, 0, 1, 1], [], []>} : vector<8x32xf32>, vector<32x128xf32>, vector<8x128xf32> -> vector<8x128xf32>
    %15 = tpu.concatenate %10, %14 in 1 : vector<8x128xf32>, vector<8x128xf32> -> vector<8x256xf32>
    %c0_14 = arith.constant 0 : index
    %c0_15 = arith.constant 0 : index
    %c0_16 = arith.constant 0 : index
    %16 = vector.load %arg5[%c0_14, %c0_15, %c0_16] : memref<1x1x256xf32, #tpu.memory_space<vmem>>, vector<1x1x256xf32>
    %17 = vector.shape_cast %16 : vector<1x1x256xf32> to vector<1x256xf32>
    %18 = vector.broadcast %17 : vector<1x256xf32> to vector<8x256xf32>
    %19 = arith.addf %15, %18 : vector<8x256xf32>
    %c0_17 = arith.constant 0 : index
    %c0_18 = arith.constant 0 : index
    %c0_19 = arith.constant 0 : index
    %20 = vector.load %arg6[%c0_17, %c0_18, %c0_19] : memref<1x8x256xf32, #tpu.memory_space<vmem>>, vector<1x8x256xf32>
    %21 = vector.shape_cast %20 : vector<1x8x256xf32> to vector<8x256xf32>
    %22 = vector.shape_cast %19 : vector<8x256xf32> to vector<1x8x256xf32>
    tpu.vector_store %arg6[%c0_17, %c0_18, %c0_19], %22 {strides = array<i32>} : memref<1x8x256xf32, #tpu.memory_space<vmem>>, vector<1x8x256xf32>,
    return
  }
  func.func @transform_0(%arg0: i32) -> (i32, i32, i32) {
    %c0_i32 = arith.constant 0 : i32
    %c0_i32_0 = arith.constant 0 : i32
    %c0_i32_1 = arith.constant 0 : i32
    return %arg0, %c0_i32, %c0_i32_0 : i32, i32, i32
  }
  func.func @transform_1(%arg0: i32) -> (i32, i32, i32) {
    %c0_i32 = arith.constant 0 : i32
    %c0_i32_0 = arith.constant 0 : i32
    %c0_i32_1 = arith.constant 0 : i32
    return %arg0, %c0_i32, %c0_i32_0 : i32, i32, i32
  }
  func.func @transform_2(%arg0: i32) -> (i32, i32, i32) {
    %c0_i32 = arith.constant 0 : i32
    %c0_i32_0 = arith.constant 0 : i32
    %c0_i32_1 = arith.constant 0 : i32
    return %arg0, %c0_i32, %c0_i32_0 : i32, i32, i32
  }
  func.func @transform_3(%arg0: i32) -> (i32, i32, i32) {
    %c0_i32 = arith.constant 0 : i32
    %c0_i32_0 = arith.constant 0 : i32
    %c0_i32_1 = arith.constant 0 : i32
    return %arg0, %c0_i32, %c0_i32_0 : i32, i32, i32
  }
  func.func @transform_4(%arg0: i32) -> (i32, i32, i32) {
    %c0_i32 = arith.constant 0 : i32
    %c0_i32_0 = arith.constant 0 : i32
    %c0_i32_1 = arith.constant 0 : i32
    return %arg0, %c0_i32, %c0_i32_0 : i32, i32, i32
  }
  func.func @transform_5(%arg0: i32) -> (i32, i32, i32) {
    %c0_i32 = arith.constant 0 : i32
    %c0_i32_0 = arith.constant 0 : i32
    %c0_i32_1 = arith.constant 0 : i32
    return %arg0, %c0_i32, %c0_i32_0 : i32, i32, i32
  }
}

</mosaic_0001>

<llo_original>
// kernel: forward.1
$region0: #{forward.1}
  #allocation0 [shape = 'u32[]', space=smem, size = 0x4, offset = 0x4, fixed_abs, tag = 'smem constant byte address 0x4 - core index']
  #allocation1 [shape = 'u32[144,128]{1,0:T(1,128)}', space=vmem, size = 0x12000, scoped, tag = 'internal scratch']
  %s0 = inlined_call_operand.hbm [shape: f32[3,8,48], index: 0, kind: input, shape index: {}]
  %s1 = inlined_call_operand.hbm [shape: f32[3,48,64], index: 1, kind: input, shape index: {}]
  %s2 = inlined_call_operand.hbm [shape: f32[3,32,128], index: 2, kind: input, shape index: {}]
  %s3 = inlined_call_operand.hbm [shape: f32[3,32,128], index: 3, kind: input, shape index: {}]
  %s4 = inlined_call_operand.vmem [shape: f32[3,1,256], index: 4, kind: input, shape index: {}]
  %s5 = inlined_call_operand.vmem [shape: f32[3,8,256], index: 5, kind: output, shape index: {}]
  %s6 = sld [smem:[#allocation0]]
  $region69: #{forward.1} parent=0
    _
  %s8 = ssub.s32 1, %s6
  %s9 = scalar_select 0, %s8, %s6
  $region1: #{forward.1} parent=0
    #allocation2 [shape = 'u8[8192]{0}', space=vmem, size = 0x2000, scoped, tag = 'input window, operand 0']
    #allocation3 [shape = 's32[2]{0}', space=sflag, size = 0x8, scoped, tag = 'scoped memory for forward.1']
    #allocation4 [shape = 'u8[49152]{0}', space=vmem, size = 0xc000, scoped, tag = 'input window, operand 1']
    #allocation5 [shape = 's32[2]{0}', space=sflag, size = 0x8, scoped, tag = 'scoped memory for forward.1']
    #allocation6 [shape = 'u8[32768]{0}', space=vmem, size = 0x8000, scoped, tag = 'input window, operand 2']
    #allocation7 [shape = 'u8[32768]{0}', space=vmem, size = 0x8000, scoped, tag = 'input window, operand 3']
    #allocation8 [shape = 's32[2]{0}', space=sflag, size = 0x8, scoped, tag = 'scoped memory for forward.1']
    %10 = vsyncpa [#allocation3], 0
    %s11 = scalar_lea.sflag [#allocation3], 1
    %12 = vsyncpa %s11, 0
    %13 = vsyncpa [#allocation5], 0
    %s14 = scalar_lea.sflag [#allocation5], 1
    %15 = vsyncpa %s14, 0
    %16 = vsyncpa [#allocation8], 0
    %s17 = scalar_lea.sflag [#allocation8], 1
    %18 = vsyncpa %s17, 0
    loop: start=0, step=1, limit=5
    $region2: #{forward.1} parent=1 // loop_pre_header
      _
    $region3: #{forward.1} parent=1 // loop_header
      %s20 = sphi 0, %s24
      %p21 = scmp.ge.s32.totalorder %s20, 5
      %s30 = sphi 0, %s32
      %s33 = sphi 0, %s30
      %s34 = sphi 0, %s33
      %s50 = sphi 0, %s34
      %s56 = sphi 0, %s58
      %s59 = sphi 0, %s56
      %s60 = sphi 0, %s59
      %s76 = sphi 0, %s60
      %s82 = sphi 0, %s84
      %s85 = sphi 0, %s82
      %s86 = sphi 0, %s85
      %s102 = sphi 0, %s86
      %s108 = sphi 0, %s110
      %s111 = sphi 0, %s108
      %s112 = sphi 0, %s111
      %s128 = sphi 0, %s112
      %s134 = sphi 0, %s136
      %s137 = sphi 0, %s134
      %s138 = sphi 0, %s137
      %s154 = sphi 0, %s138
      %s160 = sphi 0, %s162
      %s163 = sphi 0, %s160
      %s164 = sphi 0, %s163
      %s180 = sphi 0, %s164
    $region4: #{forward.1} parent=1 // loop_header_branch
      %23 = sbr.rel (%p21) target = $region8
    $region5: #{forward.1} parent=1 // loop_body
      %s25 = ssub.s32 %s20, 1
      %s26 = ssub.s32 %s20, 2
      %s27 = sadd.s32 %s20, 1
      %s28 = ssub.s32 %s20, %s27
      %p29 = scmp.eq.s32.totalorder %s28, 0
      %s31 = sadd.s32 %s30, 1
      %s32 = scalar_select %p29, %s30, %s31
      %p35 = pneg %p29
      %p36 = scmp.eq.s32.totalorder %s20, 2
      %p37 = por %p35, %p36
      %p38 = scmp.ne.s32.totalorder %s30, %s33
      %p39 = scmp.eq.s32.totalorder %s20, 0
      %p40 = por %p38, %p39
      %p41 = scmp.ne.s32.totalorder %s30, %s33
      %p42 = scmp.eq.s32.totalorder %s25, 2
      %p43 = por %p41, %p42
      %p44 = scmp.ne.s32.totalorder %s33, %s34
      %p45 = scmp.eq.s32.totalorder %s25, 0
      %p46 = por %p44, %p45
      %p47 = scmp.ne.s32.totalorder %s33, %s34
      %p48 = scmp.eq.s32.totalorder %s26, 2
      %p49 = por %p47, %p48
      %p51 = scmp.ne.s32.totalorder %s34, %s50
      %p52 = scmp.eq.s32.totalorder %s26, 0
      %p53 = por %p51, %p52
      %s54 = ssub.s32 %s20, %s27
      %p55 = scmp.eq.s32.totalorder %s54, 0
      %s57 = sadd.s32 %s56, 1
      %s58 = scalar_select %p55, %s56, %s57
      %p61 = pneg %p55
      %p62 = scmp.eq.s32.totalorder %s20, 2
      %p63 = por %p61, %p62
      %p64 = scmp.ne.s32.totalorder %s56, %s59
      %p65 = scmp.eq.s32.totalorder %s20, 0
      %p66 = por %p64, %p65
      %p67 = scmp.ne.s32.totalorder %s56, %s59
      %p68 = scmp.eq.s32.totalorder %s25, 2
      %p69 = por %p67, %p68
      %p70 = scmp.ne.s32.totalorder %s59, %s60
      %p71 = scmp.eq.s32.totalorder %s25, 0
      %p72 = por %p70, %p71
      %p73 = scmp.ne.s32.totalorder %s59, %s60
      %p74 = scmp.eq.s32.totalorder %s26, 2
      %p75 = por %p73, %p74
      %p77 = scmp.ne.s32.totalorder %s60, %s76
      %p78 = scmp.eq.s32.totalorder %s26, 0
      %p79 = por %p77, %p78
      %s80 = ssub.s32 %s20, %s27
      %p81 = scmp.eq.s32.totalorder %s80, 0
      %s83 = sadd.s32 %s82, 1
      %s84 = scalar_select %p81, %s82, %s83
      %p87 = pneg %p81
      %p88 = scmp.eq.s32.totalorder %s20, 2
      %p89 = por %p87, %p88
      %p90 = scmp.ne.s32.totalorder %s82, %s85
      %p91 = scmp.eq.s32.totalorder %s20, 0
      %p92 = por %p90, %p91
      %p93 = scmp.ne.s32.totalorder %s82, %s85
      %p94 = scmp.eq.s32.totalorder %s25, 2
      %p95 = por %p93, %p94
      %p96 = scmp.ne.s32.totalorder %s85, %s86
      %p97 = scmp.eq.s32.totalorder %s25, 0
      %p98 = por %p96, %p97
      %p99 = scmp.ne.s32.totalorder %s85, %s86
      %p100 = scmp.eq.s32.totalorder %s26, 2
      %p101 = por %p99, %p100
      %p103 = scmp.ne.s32.totalorder %s86, %s102
      %p104 = scmp.eq.s32.totalorder %s26, 0
      %p105 = por %p103, %p104
      %s106 = ssub.s32 %s20, %s27
      %p107 = scmp.eq.s32.totalorder %s106, 0
      %s109 = sadd.s32 %s108, 1
      %s110 = scalar_select %p107, %s108, %s109
      %p113 = pneg %p107
      %p114 = scmp.eq.s32.totalorder %s20, 2
      %p115 = por %p113, %p114
      %p116 = scmp.ne.s32.totalorder %s108, %s111
      %p117 = scmp.eq.s32.totalorder %s20, 0
      %p118 = por %p116, %p117
      %p119 = scmp.ne.s32.totalorder %s108, %s111
      %p120 = scmp.eq.s32.totalorder %s25, 2
      %p121 = por %p119, %p120
      %p122 = scmp.ne.s32.totalorder %s111, %s112
      %p123 = scmp.eq.s32.totalorder %s25, 0
      %p124 = por %p122, %p123
      %p125 = scmp.ne.s32.totalorder %s111, %s112
      %p126 = scmp.eq.s32.totalorder %s26, 2
      %p127 = por %p125, %p126
      %p129 = scmp.ne.s32.totalorder %s112, %s128
      %p130 = scmp.eq.s32.totalorder %s26, 0
      %p131 = por %p129, %p130
      %s132 = ssub.s32 %s20, %s27
      %p133 = scmp.eq.s32.totalorder %s132, 0
      %s135 = sadd.s32 %s134, 1
      %s136 = scalar_select %p133, %s134, %s135
      %p139 = pneg %p133
      %p140 = scmp.eq.s32.totalorder %s20, 2
      %p141 = por %p139, %p140
      %p142 = scmp.ne.s32.totalorder %s134, %s137
      %p143 = scmp.eq.s32.totalorder %s20, 0
      %p144 = por %p142, %p143
      %p145 = scmp.ne.s32.totalorder %s134, %s137
      %p146 = scmp.eq.s32.totalorder %s25, 2
      %p147 = por %p145, %p146
      %p148 = scmp.ne.s32.totalorder %s137, %s138
      %p149 = scmp.eq.s32.totalorder %s25, 0
      %p150 = por %p148, %p149
      %p151 = scmp.ne.s32.totalorder %s137, %s138
      %p152 = scmp.eq.s32.totalorder %s26, 2
      %p153 = por %p151, %p152
      %p155 = scmp.ne.s32.totalorder %s138, %s154
      %p156 = scmp.eq.s32.totalorder %s26, 0
      %p157 = por %p155, %p156
      %s158 = ssub.s32 %s20, %s27
      %p159 = scmp.eq.s32.totalorder %s158, 0
      %s161 = sadd.s32 %s160, 1
      %s162 = scalar_select %p159, %s160, %s161
      %p165 = pneg %p159
      %p166 = scmp.eq.s32.totalorder %s20, 2
      %p167 = por %p165, %p166
      %p168 = scmp.ne.s32.totalorder %s160, %s163
      %p169 = scmp.eq.s32.totalorder %s20, 0
      %p170 = por %p168, %p169
      %p171 = scmp.ne.s32.totalorder %s160, %s163
      %p172 = scmp.eq.s32.totalorder %s25, 2
      %p173 = por %p171, %p172
      %p174 = scmp.ne.s32.totalorder %s163, %s164
      %p175 = scmp.eq.s32.totalorder %s25, 0
      %p176 = por %p174, %p175
      %p177 = scmp.ne.s32.totalorder %s163, %s164
      %p178 = scmp.eq.s32.totalorder %s26, 2
      %p179 = por %p177, %p178
      %p181 = scmp.ne.s32.totalorder %s164, %s180
      %p182 = scmp.eq.s32.totalorder %s26, 0
      %p183 = por %p181, %p182
      %p184 = scmp.le.s32.totalorder 1, %s20
      %p185 = scmp.lt.s32.totalorder %s20, 4
      %p186 = pnand %p184, %p185
      %p187 = pneg %p186
      // Predicated region
      $region9: #{forward.1} parent=5 // pred_check
        _
      $region10: #{forward.1} parent=5 // pred_check_branch
        %189 = sbr.rel (%p186) target = $region12
      $region11: #{forward.1} parent=5 // pred_region
        %s190 = ssub.s32 %s20, 1
      $region12: #{forward.1} parent=5 // pred_fallthru
        _
      %p191 = scmp.lt.s32.totalorder %s20, 3
      // Predicated region
      $region13: #{forward.1} parent=5 // pred_check
        %p192 = pneg %p191
      $region14: #{forward.1} parent=5 // pred_check_branch
        %194 = sbr.rel (%p192) target = $region16
      $region15: #{forward.1} parent=5 // pred_region
        // Predicated region
        $region17: #{forward.1} parent=15 // pred_check
          %p195 = pneg %p40
        $region18: #{forward.1} parent=15 // pred_check_branch
          %197 = sbr.rel (%p195) target = $region20
        $region19: #{forward.1} parent=15 // pred_region
          %s198 = sand.u32 %s30, 1
          %s199 = scalar_lea.sflag [#allocation3], %s198
          %s200 = sand.u32 %s30, 1
          %s201 = smul.addr %s200, 8
          %s202 = scalar_lea.vmem [#allocation2], %s201
          %s204 = ssub.s32 128, 128
          %205 = vsyncadd %s199, %s204
          %s206 = smul.addr %s20, 128
          %s207 = scalar_lea.hbm %s0, %s206
          %s209 = sshll.u32 %s202, 4
          %s210 = int_to_ptr.vmem [resolvable:$true] %s209
          %212 = dma.hbm_to_vmem [thread:$0]  %s207, 128, %s210, %s199
        $region20: #{forward.1} parent=15 // pred_fallthru
          _
        // Predicated region
        $region21: #{forward.1} parent=15 // pred_check
          %p213 = pneg %p66
        $region22: #{forward.1} parent=15 // pred_check_branch
          %215 = sbr.rel (%p213) target = $region24
        $region23: #{forward.1} parent=15 // pred_region
          %s216 = sand.u32 %s20, 1
          %s217 = scalar_lea.sflag [#allocation5], %s216
          %s218 = sand.u32 %s56, 1
          %s219 = smul.addr %s218, 48
          %s220 = scalar_lea.vmem [#allocation4], %s219
          %s222 = ssub.s32 768, 768
          %223 = vsyncadd %s217, %s222
          %s224 = smul.addr %s20, 6
          %s225 = smul.addr %s224, 128
          %s226 = scalar_lea.hbm %s1, %s225
          %s227 = sshll.u32 %s220, 4
          %s228 = int_to_ptr.vmem [resolvable:$true] %s227
          %233 = dma.hbm_to_vmem [thread:$0]  %s226, 768, %s228, %s217, 128, 128, 8
        $region24: #{forward.1} parent=15 // pred_fallthru
          _
        // Predicated region
        $region25: #{forward.1} parent=15 // pred_check
          %p234 = pneg %p92
        $region26: #{forward.1} parent=15 // pred_check_branch
          %236 = sbr.rel (%p234) target = $region28
        $region27: #{forward.1} parent=15 // pred_region
          %s237 = sand.u32 %s20, 1
          %s238 = scalar_lea.sflag [#allocation5], %s237
          %s239 = sand.u32 %s82, 1
          %s240 = smul.addr %s239, 32
          %s241 = scalar_lea.vmem [#allocation6], %s240
          %s243 = ssub.s32 512, 512
          %244 = vsyncadd %s238, %s243
          %s245 = smul.addr %s20, 4
          %s246 = smul.addr %s245, 128
          %s247 = scalar_lea.hbm %s2, %s246
          %s248 = sshll.u32 %s241, 4
          %s249 = int_to_ptr.vmem [resolvable:$true] %s248
          %254 = dma.hbm_to_vmem [thread:$0]  %s247, 512, %s249, %s238, 128, 128, 8
        $region28: #{forward.1} parent=15 // pred_fallthru
          _
        // Predicated region
        $region29: #{forward.1} parent=15 // pred_check
          %p255 = pneg %p118
        $region30: #{forward.1} parent=15 // pred_check_branch
          %257 = sbr.rel (%p255) target = $region32
        $region31: #{forward.1} parent=15 // pred_region
          %s258 = sand.u32 %s108, 1
          %s259 = scalar_lea.sflag [#allocation8], %s258
          %s260 = sand.u32 %s108, 1
          %s261 = smul.addr %s260, 32
          %s262 = scalar_lea.vmem [#allocation7], %s261
          %s264 = ssub.s32 512, 512
          %265 = vsyncadd %s259, %s264
          %s266 = smul.addr %s20, 4
          %s267 = smul.addr %s266, 128
          %s268 = scalar_lea.hbm %s3, %s267
          %s269 = sshll.u32 %s262, 4
          %s270 = int_to_ptr.vmem [resolvable:$true] %s269
          %275 = dma.hbm_to_vmem [thread:$0]  %s268, 512, %s270, %s259, 128, 128, 8
        $region32: #{forward.1} parent=15 // pred_fallthru
          _
        // Predicated region
        $region33: #{forward.1} parent=15 // pred_check
          %p276 = pneg %p144
        $region34: #{forward.1} parent=15 // pred_check_branch
          %278 = sbr.rel (%p276) target = $region36
        $region35: #{forward.1} parent=15 // pred_region
          %p279 = scmp.lt.s32.totalorder %s20, 2
          %s280 = scalar_select %p279, %s20, 2
          %s281 = smul.addr %s280, 2
          %s282 = scalar_lea.vmem %s4, %s281
        $region36: #{forward.1} parent=15 // pred_fallthru
          _
      $region16: #{forward.1} parent=5 // pred_fallthru
        _
      %p283 = scmp.le.s32.totalorder 1, %s20
      %p284 = scmp.lt.s32.totalorder %s20, 4
      %p285 = pnand %p283, %p284
      %p286 = pneg %p285
      // Predicated region
      $region37: #{forward.1} parent=5 // pred_check
        _
      $region38: #{forward.1} parent=5 // pred_check_branch
        %288 = sbr.rel (%p285) target = $region40
      $region39: #{forward.1} parent=5 // pred_region
        %s289 = ssub.s32 %s20, 1
        %s290 = sand.u32 %s33, 1
        %s291 = scalar_lea.sflag [#allocation3], %s290
        %s292 = sand.u32 %s33, 1
        %s293 = smul.addr %s292, 8
        %s294 = scalar_lea.vmem [#allocation2], %s293
        // Predicated region
        $region41: #{forward.1} parent=39 // pred_check
          %p295 = pneg %p46
        $region42: #{forward.1} parent=39 // pred_check_branch
          %297 = sbr.rel (%p295) target = $region44
        $region43: #{forward.1} parent=39 // pred_region
          %298 = dma.done %s291, 128
        $region44: #{forward.1} parent=39 // pred_fallthru
          _
        %s299 = sand.u32 %s25, 1
        %s300 = scalar_lea.sflag [#allocation5], %s299
        %s301 = sand.u32 %s59, 1
        %s302 = smul.addr %s301, 48
        %s303 = scalar_lea.vmem [#allocation4], %s302
        // Predicated region
        $region45: #{forward.1} parent=39 // pred_check
          %p304 = pneg %p72
        $region46: #{forward.1} parent=39 // pred_check_branch
          %306 = sbr.rel (%p304) target = $region48
        $region47: #{forward.1} parent=39 // pred_region
          %307 = dma.done %s300, 768
        $region48: #{forward.1} parent=39 // pred_fallthru
          _
        %s308 = sand.u32 %s25, 1
        %s309 = scalar_lea.sflag [#allocation5], %s308
        %s310 = sand.u32 %s85, 1
        %s311 = smul.addr %s310, 32
        %s312 = scalar_lea.vmem [#allocation6], %s311
        // Predicated region
        $region49: #{forward.1} parent=39 // pred_check
          %p313 = pneg %p98
        $region50: #{forward.1} parent=39 // pred_check_branch
          %315 = sbr.rel (%p313) target = $region52
        $region51: #{forward.1} parent=39 // pred_region
          %316 = dma.done %s309, 512
        $region52: #{forward.1} parent=39 // pred_fallthru
          _
        %s317 = sand.u32 %s111, 1
        %s318 = scalar_lea.sflag [#allocation8], %s317
        %s319 = sand.u32 %s111, 1
        %s320 = smul.addr %s319, 32
        %s321 = scalar_lea.vmem [#allocation7], %s320
        // Predicated region
        $region53: #{forward.1} parent=39 // pred_check
          %p322 = pneg %p124
        $region54: #{forward.1} parent=39 // pred_check_branch
          %324 = sbr.rel (%p322) target = $region56
        $region55: #{forward.1} parent=39 // pred_region
          %325 = dma.done %s318, 512
        $region56: #{forward.1} parent=39 // pred_fallthru
          _
        %s326 = sand.u32 %s33, 1
        %s327 = scalar_lea.sflag [#allocation3], %s326
        %s328 = sand.u32 %s33, 1
        %s329 = smul.addr %s328, 8
        %s330 = scalar_lea.vmem [#allocation2], %s329
        %p331 = pneg %p46
        %p332 = pneg %p43
        %s333 = sand.u32 %s25, 1
        %s334 = scalar_lea.sflag [#allocation5], %s333
        %s335 = sand.u32 %s59, 1
        %s336 = smul.addr %s335, 48
        %s337 = scalar_lea.vmem [#allocation4], %s336
        %p338 = pneg %p72
        %p339 = pneg %p69
        %s340 = sand.u32 %s25, 1
        %s341 = scalar_lea.sflag [#allocation5], %s340
        %s342 = sand.u32 %s85, 1
        %s343 = smul.addr %s342, 32
        %s344 = scalar_lea.vmem [#allocation6], %s343
        %p345 = pneg %p98
        %p346 = pneg %p95
        %s347 = sand.u32 %s111, 1
        %s348 = scalar_lea.sflag [#allocation8], %s347
        %s349 = sand.u32 %s111, 1
        %s350 = smul.addr %s349, 32
        %s351 = scalar_lea.vmem [#allocation7], %s350
        %p352 = pneg %p124
        %p353 = pneg %p121
        %p354 = scmp.lt.s32.totalorder %s25, 2
        %s355 = scalar_select %p354, %s25, 2
        %s356 = smul.addr %s355, 2
        %s357 = scalar_lea.vmem %s4, %s356
        %p358 = pneg %p150
        %p359 = pneg %p147
        %p360 = pneg %p176
        %p361 = pneg %p173
        %p362 = scmp.lt.s32.totalorder %s25, 2
        %s363 = scalar_select %p362, %s25, 2
        %s364 = smul.addr %s363, 2
        %s365 = smul.addr %s364, 8
        %s366 = scalar_lea.vmem %s5, %s365
        %p367 = scmp.lt.s32.totalorder %s25, 2
        %s368 = scalar_select %p367, %s25, 2
        %s369 = smul.addr %s368, 2
        %s370 = scalar_lea.vmem %s4, %s369
        %p371 = scmp.lt.s32.totalorder %s25, 2
        %s372 = scalar_select %p371, %s25, 2
        %s373 = smul.addr %s372, 2
        %s374 = smul.addr %s373, 8
        %s375 = scalar_lea.vmem %s5, %s374
        %v376 = vld [vmem:[%s294] sm:$0xff]
        %v377 = vld [vmem:[%s303] sm:$0xff]
        %v378 = vld [vmem:[%s303 + $0x8] sm:$0xff]
        %v379 = vld [vmem:[%s303 + $0x10] sm:$0xff]
        %v380 = vld [vmem:[%s303 + $0x18] sm:$0xff]
        %v381 = vld [vmem:[%s303 + $0x20] sm:$0xff]
        %v382 = vld [vmem:[%s303 + $0x28] sm:$0xff]
        %vm383 = vcmask 392192
        %v385 = vsel %vm383, %v376, 0
        %387 = vmatprep.subr.mxu0 0.0
        %388 = vmatpush1.msra.mxu0 %v377
        %389 = vmatprep.subr.mxu0 0.0
        %390 = vmatpush1.msra.mxu0 %v378
        %391 = vmatprep.subr.mxu0 0.0
        %392 = vmatpush1.msra.mxu0 %v379
        %393 = vmatprep.subr.mxu0 0.0
        %394 = vmatpush1.msra.mxu0 %v380
        %395 = vmatprep.subr.mxu0 0.0
        %396 = vmatpush1.msra.mxu0 %v381
        %397 = vmatprep.subr.mxu0 0.0
        %398 = vmatpush1.msra.mxu0 %v382
        %399 = vmatprep.subr.mxu0 0.0
        %400 = vmatpush1.msra.mxu0 0.0
        %401 = vmatprep.subr.mxu0 0.0
        %402 = vmatpush1.msra.mxu0 0.0
        %403 = vmatprep.subr.mxu0 0.0
        %404 = vmatpush1.msra.mxu0 0.0
        %405 = vmatprep.subr.mxu0 0.0
        %406 = vmatpush1.msra.mxu0 0.0
        %407 = vmatprep.subr.mxu0 0.0
        %408 = vmatpush1.msra.mxu0 0.0
        %409 = vmatprep.subr.mxu0 0.0
        %410 = vmatpush1.msra.mxu0 0.0
        %411 = vmatprep.subr.mxu0 0.0
        %412 = vmatpush1.msra.mxu0 0.0
        %413 = vmatprep.subr.mxu0 0.0
        %414 = vmatpush1.msra.mxu0 0.0
        %415 = vmatprep.subr.mxu0 0.0
        %416 = vmatpush1.msra.mxu0 0.0
        %417 = vmatprep.subr.mxu0 0.0
        %418 = vmatpush1.msra.mxu0 0.0
        %419 = vmatprep.subr.mxu0 0.0
        %420 = vmatpush1.msra.mxu0 0.0
        %421 = vmatprep.subr.mxu0 0.0
        %422 = vmatpush1.msra.mxu0 0.0
        %423 = vmatprep.subr.mxu0 0.0
        %424 = vmatpush1.msra.mxu0 0.0
        %425 = vmatprep.subr.mxu0 0.0
        %426 = vmatpush1.msra.mxu0 0.0
        %427 = vmatprep.subr.mxu0 0.0
        %428 = vmatpush1.msra.mxu0 0.0
        %429 = vmatprep.subr.mxu0 0.0
        %430 = vmatpush1.msra.mxu0 0.0
        %431 = vmatprep.subr.mxu0 0.0
        %432 = vmatpush1.msra.mxu0 0.0
        %433 = vmatprep.subr.mxu0 0.0
        %434 = vmatpush1.msra.mxu0 0.0
        %435 = vmatprep.subr.mxu0 0.0
        %436 = vmatpush1.msra.mxu0 0.0
        %437 = vmatprep.subr.mxu0 0.0
        %438 = vmatpush1.msra.mxu0 0.0
        %439 = vmatprep.subr.mxu0 0.0
        %440 = vmatpush1.msra.mxu0 0.0
        %441 = vmatprep.subr.mxu0 0.0
        %442 = vmatpush1.msra.mxu0 0.0
        %443 = vmatprep.subr.mxu0 0.0
        %444 = vmatpush1.msra.mxu0 0.0
        %445 = vmatprep.subr.mxu0 0.0
        %446 = vmatpush1.msra.mxu0 0.0
        %447 = vmatprep.subr.mxu0 0.0
        %448 = vmatpush1.msra.mxu0 0.0
        %449 = vmatprep.subr.mxu0 0.0
        %450 = vmatpush1.msra.mxu0 0.0
        %451 = vmatprep.mubr.f32.mxu0 0.0
        %452 = vmatmul.mubr.f32.gmra.mrb[0].mxu0 %v385
        %v453 = vpop.f32.mrb[0].mxu0
        %v454 = vadd.f32 0.0, %v453
        %v455 = vpop.f32.mrb[0].mxu0
        %456 = vdwg.mxu0
        %v457 = vmax.f32 %v454, 0.0
        %v458 = vld [vmem:[%s312] sm:$0xff]
        %v459 = vld [vmem:[%s312 + $0x8] sm:$0xff]
        %v460 = vld [vmem:[%s312 + $0x10] sm:$0xff]
        %v461 = vld [vmem:[%s312 + $0x18] sm:$0xff]
        %vm462 = vcmask 261120
        %v464 = vsel %vm462, %v457, 0
        %466 = vmatprep.subr.mxu0 0.0
        %467 = vmatpush1.msra.mxu0 %v458
        %468 = vmatprep.subr.mxu0 0.0
        %469 = vmatpush1.msra.mxu0 %v459
        %470 = vmatprep.subr.mxu0 0.0
        %471 = vmatpush1.msra.mxu0 %v460
        %472 = vmatprep.subr.mxu0 0.0
        %473 = vmatpush1.msra.mxu0 %v461
        %474 = vmatprep.subr.mxu0 0.0
        %475 = vmatpush1.msra.mxu0 0.0
        %476 = vmatprep.subr.mxu0 0.0
        %477 = vmatpush1.msra.mxu0 0.0
        %478 = vmatprep.subr.mxu0 0.0
        %479 = vmatpush1.msra.mxu0 0.0
        %480 = vmatprep.subr.mxu0 0.0
        %481 = vmatpush1.msra.mxu0 0.0
        %482 = vmatprep.subr.mxu0 0.0
        %483 = vmatpush1.msra.mxu0 0.0
        %484 = vmatprep.subr.mxu0 0.0
        %485 = vmatpush1.msra.mxu0 0.0
        %486 = vmatprep.subr.mxu0 0.0
        %487 = vmatpush1.msra.mxu0 0.0
        %488 = vmatprep.subr.mxu0 0.0
        %489 = vmatpush1.msra.mxu0 0.0
        %490 = vmatprep.subr.mxu0 0.0
        %491 = vmatpush1.msra.mxu0 0.0
        %492 = vmatprep.subr.mxu0 0.0
        %493 = vmatpush1.msra.mxu0 0.0
        %494 = vmatprep.subr.mxu0 0.0
        %495 = vmatpush1.msra.mxu0 0.0
        %496 = vmatprep.subr.mxu0 0.0
        %497 = vmatpush1.msra.mxu0 0.0
        %498 = vmatprep.subr.mxu0 0.0
        %499 = vmatpush1.msra.mxu0 0.0
        %500 = vmatprep.subr.mxu0 0.0
        %501 = vmatpush1.msra.mxu0 0.0
        %502 = vmatprep.subr.mxu0 0.0
        %503 = vmatpush1.msra.mxu0 0.0
        %504 = vmatprep.subr.mxu0 0.0
        %505 = vmatpush1.msra.mxu0 0.0
        %506 = vmatprep.subr.mxu0 0.0
        %507 = vmatpush1.msra.mxu0 0.0
        %508 = vmatprep.subr.mxu0 0.0
        %509 = vmatpush1.msra.mxu0 0.0
        %510 = vmatprep.subr.mxu0 0.0
        %511 = vmatpush1.msra.mxu0 0.0
        %512 = vmatprep.subr.mxu0 0.0
        %513 = vmatpush1.msra.mxu0 0.0
        %514 = vmatprep.subr.mxu0 0.0
        %515 = vmatpush1.msra.mxu0 0.0
        %516 = vmatprep.subr.mxu0 0.0
        %517 = vmatpush1.msra.mxu0 0.0
        %518 = vmatprep.subr.mxu0 0.0
        %519 = vmatpush1.msra.mxu0 0.0
        %520 = vmatprep.subr.mxu0 0.0
        %521 = vmatpush1.msra.mxu0 0.0
        %522 = vmatprep.subr.mxu0 0.0
        %523 = vmatpush1.msra.mxu0 0.0
        %524 = vmatprep.subr.mxu0 0.0
        %525 = vmatpush1.msra.mxu0 0.0
        %526 = vmatprep.subr.mxu0 0.0
        %527 = vmatpush1.msra.mxu0 0.0
        %528 = vmatprep.subr.mxu0 0.0
        %529 = vmatpush1.msra.mxu0 0.0
        %530 = vmatprep.mubr.f32.mxu0 0.0
        %531 = vmatmul.mubr.f32.gmra.mrb[0].mxu0 %v464
        %v532 = vpop.f32.mrb[0].mxu0
        %v533 = vadd.f32 0.0, %v532
        %v534 = vpop.f32.mrb[0].mxu0
        %535 = vdwg.mxu0
        %v536 = vld [vmem:[%s321] sm:$0xff]
        %v537 = vld [vmem:[%s321 + $0x8] sm:$0xff]
        %v538 = vld [vmem:[%s321 + $0x10] sm:$0xff]
        %v539 = vld [vmem:[%s321 + $0x18] sm:$0xff]
        %540 = vrot.lane.b32.xlu0 %v457, 96
        %v541 = vpop.permute.xlu0 %540
        %v542 = vsel %vm462, %v541, 0
        %544 = vmatprep.subr.mxu0 0.0
        %545 = vmatpush1.msra.mxu0 %v536
        %546 = vmatprep.subr.mxu0 0.0
        %547 = vmatpush1.msra.mxu0 %v537
        %548 = vmatprep.subr.mxu0 0.0
        %549 = vmatpush1.msra.mxu0 %v538
        %550 = vmatprep.subr.mxu0 0.0
        %551 = vmatpush1.msra.mxu0 %v539
        %552 = vmatprep.subr.mxu0 0.0
        %553 = vmatpush1.msra.mxu0 0.0
        %554 = vmatprep.subr.mxu0 0.0
        %555 = vmatpush1.msra.mxu0 0.0
        %556 = vmatprep.subr.mxu0 0.0
        %557 = vmatpush1.msra.mxu0 0.0
        %558 = vmatprep.subr.mxu0 0.0
        %559 = vmatpush1.msra.mxu0 0.0
        %560 = vmatprep.subr.mxu0 0.0
        %561 = vmatpush1.msra.mxu0 0.0
        %562 = vmatprep.subr.mxu0 0.0
        %563 = vmatpush1.msra.mxu0 0.0
        %564 = vmatprep.subr.mxu0 0.0
        %565 = vmatpush1.msra.mxu0 0.0
        %566 = vmatprep.subr.mxu0 0.0
        %567 = vmatpush1.msra.mxu0 0.0
        %568 = vmatprep.subr.mxu0 0.0
        %569 = vmatpush1.msra.mxu0 0.0
        %570 = vmatprep.subr.mxu0 0.0
        %571 = vmatpush1.msra.mxu0 0.0
        %572 = vmatprep.subr.mxu0 0.0
        %573 = vmatpush1.msra.mxu0 0.0
        %574 = vmatprep.subr.mxu0 0.0
        %575 = vmatpush1.msra.mxu0 0.0
        %576 = vmatprep.subr.mxu0 0.0
        %577 = vmatpush1.msra.mxu0 0.0
        %578 = vmatprep.subr.mxu0 0.0
        %579 = vmatpush1.msra.mxu0 0.0
        %580 = vmatprep.subr.mxu0 0.0
        %581 = vmatpush1.msra.mxu0 0.0
        %582 = vmatprep.subr.mxu0 0.0
        %583 = vmatpush1.msra.mxu0 0.0
        %584 = vmatprep.subr.mxu0 0.0
        %585 = vmatpush1.msra.mxu0 0.0
        %586 = vmatprep.subr.mxu0 0.0
        %587 = vmatpush1.msra.mxu0 0.0
        %588 = vmatprep.subr.mxu0 0.0
        %589 = vmatpush1.msra.mxu0 0.0
        %590 = vmatprep.subr.mxu0 0.0
        %591 = vmatpush1.msra.mxu0 0.0
        %592 = vmatprep.subr.mxu0 0.0
        %593 = vmatpush1.msra.mxu0 0.0
        %594 = vmatprep.subr.mxu0 0.0
        %595 = vmatpush1.msra.mxu0 0.0
        %596 = vmatprep.subr.mxu0 0.0
        %597 = vmatpush1.msra.mxu0 0.0
        %598 = vmatprep.subr.mxu0 0.0
        %599 = vmatpush1.msra.mxu0 0.0
        %600 = vmatprep.subr.mxu0 0.0
        %601 = vmatpush1.msra.mxu0 0.0
        %602 = vmatprep.subr.mxu0 0.0
        %603 = vmatpush1.msra.mxu0 0.0
        %604 = vmatprep.subr.mxu0 0.0
        %605 = vmatpush1.msra.mxu0 0.0
        %606 = vmatprep.subr.mxu0 0.0
        %607 = vmatpush1.msra.mxu0 0.0
        %608 = vmatprep.mubr.f32.mxu0 0.0
        %609 = vmatmul.mubr.f32.gmra.mrb[0].mxu0 %v542
        %v610 = vpop.f32.mrb[0].mxu0
        %v611 = vadd.f32 0.0, %v610
        %v612 = vpop.f32.mrb[0].mxu0
        %613 = vdwg.mxu0
        %v614 = vld [vmem:[%s370] sm:$0x3]
        %v616 = vlaneseq
        %v617 = vshrl.u32 %v616, 7
        %v618 = vsub.s32 0, %v617
        %v619 = vrot.slane %v614, %v618
        %v620 = vlaneseq
        %v621 = vshrl.u32 %v620, 7
        %v622 = vsub.s32 1, %v621
        %v623 = vrot.slane %v614, %v622
        %v626 = vadd.f32 %v533, %v619
        %v627 = vadd.f32 %v611, %v623
        %628 = vst [vmem:[%s375] sm:$0xff] %v626
        %629 = vst [vmem:[%s375 + $0x8] sm:$0xff] %v627
        %p630 = scmp.lt.s32.totalorder %s25, 2
        %s631 = scalar_select %p630, %s25, 2
        %s632 = smul.addr %s631, 2
        %s633 = smul.addr %s632, 8
        %s634 = scalar_lea.vmem %s5, %s633
        // Predicated region
        $region57: #{forward.1} parent=39 // pred_check
          %p635 = pneg %p173
        $region58: #{forward.1} parent=39 // pred_check_branch
          %637 = sbr.rel (%p635) target = $region60
        $region59: #{forward.1} parent=39 // pred_region
          _
        $region60: #{forward.1} parent=39 // pred_fallthru
          _
      $region40: #{forward.1} parent=5 // pred_fallthru
        _
      %p638 = scmp.le.s32.totalorder 2, %s20
      // Predicated region
      $region61: #{forward.1} parent=5 // pred_check
        %p639 = pneg %p638
      $region62: #{forward.1} parent=5 // pred_check_branch
        %641 = sbr.rel (%p639) target = $region64
      $region63: #{forward.1} parent=5 // pred_region
        %s642 = ssub.s32 %s20, 2
        // Predicated region
        $region65: #{forward.1} parent=63 // pred_check
          %p643 = pneg %p179
        $region66: #{forward.1} parent=63 // pred_check_branch
          %645 = sbr.rel (%p643) target = $region68
        $region67: #{forward.1} parent=63 // pred_region
          %p646 = scmp.lt.s32.totalorder %s26, 2
          %s647 = scalar_select %p646, %s26, 2
          %s648 = smul.addr %s647, 2
          %s649 = smul.addr %s648, 8
          %s650 = scalar_lea.vmem %s5, %s649
        $region68: #{forward.1} parent=63 // pred_fallthru
          _
      $region64: #{forward.1} parent=5 // pred_fallthru
        _
    $region6: #{forward.1} parent=1 // loop_footer
      %s24 = sadd.s32 1, %s20
    $region7: #{forward.1} parent=1 // loop_footer_branch
      %19 = sbr.rel target = $region3
    $region8: #{forward.1} parent=1 // loop_exit
      _
    %651 = vsyncpa [#allocation3], 1
    %s652 = scalar_lea.sflag [#allocation3], 1
    %653 = vsyncpa %s652, 1
    %654 = vsyncpa [#allocation5], 1
    %s655 = scalar_lea.sflag [#allocation5], 1
    %656 = vsyncpa %s655, 1
    %657 = vsyncpa [#allocation8], 1
    %s658 = scalar_lea.sflag [#allocation8], 1
    %659 = vsyncpa %s658, 1

</llo_original>
